<compile_context>
chip_gen: v7x
topology: tpu7x:2x2x1
jax: 0.10.0
libtpu: 0.0.40
codegen_flags: <defaults>
</compile_context>

<pallas_src>
import functools

import jax
import jax.numpy as jnp
from jax.experimental import pallas as pl
from jax.experimental.pallas import tpu as pltpu


def _router_kernel(x_ref, w_ref, logits_ref, weights_ref, experts_ref, *, k):
    # x: [TM, H] in its native dtype; w: [H, E] pre-transposed in the wrapper.
    # MXU matmul with f32 accumulation (native bf16 path if inputs are bf16).
    logits = jnp.dot(x_ref[...], w_ref[...],
                     preferred_element_type=jnp.float32)            # [TM, E] f32
    logits_ref[...] = logits.astype(logits_ref.dtype)

    # Softmax over experts (router probabilities) in f32.
    m = jnp.max(logits, axis=-1, keepdims=True)
    e = jnp.exp(logits - m)
    probs = e / jnp.sum(e, axis=-1, keepdims=True)                   # [TM, E]

    num_experts = logits.shape[-1]
    iota = jax.lax.broadcasted_iota(jnp.int32, logits.shape, 1)      # [TM, E]

    # Iterative top-k (k is tiny, e.g. 2): argmax via masked min-index,
    # tie-break on lowest expert index.
    masked = probs
    sel_cols = []
    val_cols = []
    for _ in range(k):
        v = jnp.max(masked, axis=-1, keepdims=True)                  # [TM, 1]
        is_max = masked == v
        idx = jnp.min(jnp.where(is_max, iota, num_experts),
                      axis=-1, keepdims=True)                        # [TM, 1]
        hit = iota == idx
        sel_cols.append(idx)
        val_cols.append(v)
        # mask out the selected expert (probs >= 0, so -1 is safely below min)
        masked = jnp.where(hit, -1.0, masked)

    sel = jnp.concatenate(sel_cols, axis=-1)                         # [TM, K] int32
    vals = jnp.concatenate(val_cols, axis=-1)                        # [TM, K] f32

    # normalize_router_prob_before_dropping == False (default):
    # routing_weights = softmax(gather(logits, sel)), which is mathematically
    # identical to renormalizing the gathered softmax probabilities.
    gw = vals / jnp.sum(vals, axis=-1, keepdims=True)                # [TM, K]

    weights_ref[...] = gw.astype(weights_ref.dtype)
    experts_ref[...] = sel.astype(jnp.int32)


def _round_up(a, b):
    return (a + b - 1) // b * b


def topk_router(hidden_states, classifier_weight, num_experts_per_tok=2,
                tm=256):
    """hidden_states: [B, S, H]; classifier_weight: [E, H] (nn.Linear layout).

    Returns (routing_weights [B*S, K] f32, selected_experts [B*S, K] int32,
             router_logits [B*S, E] f32)."""
    B, S, H = hidden_states.shape
    E, Hw = classifier_weight.shape
    assert H == Hw
    T = B * S
    K = num_experts_per_tok

    x = hidden_states.reshape(T, H)
    w_he = classifier_weight.T                 # [H, E], transposed once here.

    # TODO(synk): router_jitter_noise (training-only additive noise) is not
    # applied here; this implements eval-mode forward semantics.

    # Effective token tile: multiple of 8, never larger than (rounded-up) T.
    tm_eff = _round_up(min(tm, _round_up(T, 8)), 8)
    T_pad = _round_up(T, tm_eff)
    if T_pad != T:
        x = jnp.pad(x, ((0, T_pad - T), (0, 0)))

    # Raise the scoped VMEM limit only if the double-buffered tile footprint
    # needs it; cap at 64 MiB so the sizing is also safe on v7x.
    itemsize_x = jnp.dtype(x.dtype).itemsize
    itemsize_w = jnp.dtype(w_he.dtype).itemsize
    footprint = (2 * tm_eff * H * itemsize_x        # x tile (double buffered)
                 + 2 * H * E * itemsize_w           # weight (double buffered)
                 + 2 * tm_eff * E * 4               # logits tile
                 + 4 * tm_eff * K * 4)              # weights + experts tiles
    vmem_limit = None
    if footprint > (28 << 20):
        vmem_limit = int(min(64 << 20, 2 * footprint))

    kernel = functools.partial(_router_kernel, k=K)

    grid = (T_pad // tm_eff,)
    out_shapes = (
        jax.ShapeDtypeStruct((T_pad, E), jnp.float32),    # router_logits
        jax.ShapeDtypeStruct((T_pad, K), jnp.float32),    # routing_weights
        jax.ShapeDtypeStruct((T_pad, K), jnp.int32),      # selected_experts
    )
    logits, weights, experts = pl.pallas_call(
        kernel,
        out_shape=out_shapes,
        grid_spec=pltpu.PrefetchScalarGridSpec(
            num_scalar_prefetch=0,
            grid=grid,
            in_specs=[
                pl.BlockSpec((tm_eff, H), lambda i: (i, 0)),   # tokens tile
                pl.BlockSpec((H, E), lambda i: (0, 0)),        # full weight [H,E]
            ],
            out_specs=[
                pl.BlockSpec((tm_eff, E), lambda i: (i, 0)),
                pl.BlockSpec((tm_eff, K), lambda i: (i, 0)),
                pl.BlockSpec((tm_eff, K), lambda i: (i, 0)),
            ],
        ),
        compiler_params=pltpu.CompilerParams(
            dimension_semantics=("parallel",),
            vmem_limit_bytes=vmem_limit),
    )(x, w_he)

    if T_pad != T:
        logits = logits[:T]
        weights = weights[:T]
        experts = experts[:T]
    return weights, experts, logits


def _reference(hidden_states, w, k):
    B, S, H = hidden_states.shape
    x = hidden_states.reshape(-1, H)
    logits = x @ w.T
    probs = jax.nn.softmax(logits, axis=-1)
    vals, idx = jax.lax.top_k(probs, k)
    gathered = jnp.take_along_axis(logits, idx, axis=-1)
    weights = jax.nn.softmax(gathered, axis=-1)
    return weights, idx, logits


if __name__ == "__main__":
    # Small config consistent with the module: hidden=32, experts=8, top-2.
    B, S, H, E, K = 2, 8, 32, 8, 2

    key = jax.random.PRNGKey(0)
    kx, kw = jax.random.split(key)
    hidden_states = jax.random.normal(kx, (B, S, H), dtype=jnp.float32)
    # Deterministic nn.Linear-like init (uniform in [-1/sqrt(H), 1/sqrt(H)]).
    bound = 1.0 / (H ** 0.5)
    classifier_weight = jax.random.uniform(
        kw, (E, H), dtype=jnp.float32, minval=-bound, maxval=bound)

    weights, experts, logits = topk_router(hidden_states, classifier_weight, K)
    jax.block_until_ready((weights, experts, logits))

    ref_w, ref_i, ref_l = _reference(hidden_states, classifier_weight, K)
    assert jnp.allclose(logits, ref_l, atol=1e-5, rtol=1e-5)
    assert jnp.array_equal(experts, ref_i.astype(jnp.int32))
    assert jnp.allclose(weights, ref_w, atol=1e-5, rtol=1e-5)

    print("KERNEL_OK")
</pallas_src>

<mosaic_0001>
module attributes {stable_mosaic.version = 11 : i64} {
  func.func @_router_kernel(%arg0: i32, %arg1: memref<16x32xf32, #tpu.memory_space<vmem>>, %arg2: memref<32x8xf32, #tpu.memory_space<vmem>>, %arg3: memref<16x8xf32, #tpu.memory_space<vmem>>, %arg4: memref<16x2xf32, #tpu.memory_space<vmem>>, %arg5: memref<16x2xi32, #tpu.memory_space<vmem>>) attributes {dimension_semantics = [#tpu.dimension_semantics<parallel>], iteration_bounds = array<i64: 1>, scalar_prefetch = 0 : i64, scratch_operands = 0 : i64, tpu.core_type = #tpu.core_type<tc>, window_params = [{transform_indices = @transform_0, window_bounds = array<i64: 16, 32>}, {pipeline_mode = #tpu.pipeline_mode<synchronous>, transform_indices = @transform_1, window_bounds = array<i64: 32, 8>}, {transform_indices = @transform_2, window_bounds = array<i64: 16, 8>}, {transform_indices = @transform_3, window_bounds = array<i64: 16, 2>}, {transform_indices = @transform_4, window_bounds = array<i64: 16, 2>}]} {
    %c0 = arith.constant 0 : index
    %c0_0 = arith.constant 0 : index
    %0 = vector.load %arg1[%c0, %c0_0] : memref<16x32xf32, #tpu.memory_space<vmem>>, vector<16x32xf32>
    %c0_1 = arith.constant 0 : index
    %c0_2 = arith.constant 0 : index
    %1 = vector.load %arg2[%c0_1, %c0_2] : memref<32x8xf32, #tpu.memory_space<vmem>>, vector<32x8xf32>
    %cst = arith.constant dense<0.000000e+00> : vector<16x8xf32>
    %2 = tpu.matmul %0, %1, %cst {dimension_numbers = #tpu.dot_dimension_numbers<[1], [0], [0], [1], [0, 0, 1, 1], [], []>} : vector<16x32xf32>, vector<32x8xf32>, vector<16x8xf32> -> vector<16x8xf32>
    %c0_3 = arith.constant 0 : index
    %c0_4 = arith.constant 0 : index
    %3 = vector.load %arg3[%c0_3, %c0_4] : memref<16x8xf32, #tpu.memory_space<vmem>>, vector<16x8xf32>
    tpu.vector_store %arg3[%c0_3, %c0_4], %2 {strides = array<i32>} : memref<16x8xf32, #tpu.memory_space<vmem>>, vector<16x8xf32>,
    %cst_5 = arith.constant dense<0xFF800000> : vector<16xf32>
    %4 = vector.multi_reduction <maximumf>, %2, %cst_5 [1] : vector<16x8xf32> to vector<16xf32>
    %5 = vector.shape_cast %4 : vector<16xf32> to vector<16x1xf32>
    %6 = vector.broadcast %5 : vector<16x1xf32> to vector<16x8xf32>
    %7 = arith.subf %2, %6 : vector<16x8xf32>
    %8 = math.exp %7 : vector<16x8xf32>
    %cst_6 = arith.constant dense<0.000000e+00> : vector<16xf32>
    %9 = vector.multi_reduction <add>, %8, %cst_6 [1] : vector<16x8xf32> to vector<16xf32>
    %10 = vector.shape_cast %9 : vector<16xf32> to vector<16x1xf32>
    %11 = vector.broadcast %10 : vector<16x1xf32> to vector<16x8xf32>
    %12 = arith.divf %8, %11 : vector<16x8xf32>
    %13 = tpu.iota {dimensions = array<i32: 1>} : vector<16x8xi32>
    %cst_7 = arith.constant dense<0xFF800000> : vector<16xf32>
    %14 = vector.multi_reduction <maximumf>, %12, %cst_7 [1] : vector<16x8xf32> to vector<16xf32>
    %15 = vector.shape_cast %14 : vector<16xf32> to vector<16x1xf32>
    %16 = vector.broadcast %15 : vector<16x1xf32> to vector<16x8xf32>
    %17 = arith.cmpf oeq, %12, %16 : vector<16x8xf32>
    %c8_i32 = arith.constant 8 : i32
    %18 = vector.broadcast %c8_i32 : i32 to vector<16x8xi32>
    %19 = arith.select %17, %13, %18 : vector<16x8xi1>, vector<16x8xi32>
    %cst_8 = arith.constant dense<2147483647> : vector<16xi32>
    %20 = vector.multi_reduction <minsi>, %19, %cst_8 [1] : vector<16x8xi32> to vector<16xi32>
    %21 = vector.shape_cast %20 : vector<16xi32> to vector<16x1xi32>
    %22 = vector.broadcast %21 : vector<16x1xi32> to vector<16x8xi32>
    %23 = arith.cmpi eq, %13, %22 : vector<16x8xi32>
    %cst_9 = arith.constant -1.000000e+00 : f32
    %24 = vector.broadcast %cst_9 : f32 to vector<16x8xf32>
    %25 = arith.select %23, %24, %12 : vector<16x8xi1>, vector<16x8xf32>
    %cst_10 = arith.constant dense<0xFF800000> : vector<16xf32>
    %26 = vector.multi_reduction <maximumf>, %25, %cst_10 [1] : vector<16x8xf32> to vector<16xf32>
    %27 = vector.shape_cast %26 : vector<16xf32> to vector<16x1xf32>
    %28 = vector.broadcast %27 : vector<16x1xf32> to vector<16x8xf32>
    %29 = arith.cmpf oeq, %25, %28 : vector<16x8xf32>
    %c8_i32_11 = arith.constant 8 : i32
    %30 = vector.broadcast %c8_i32_11 : i32 to vector<16x8xi32>
    %31 = arith.select %29, %13, %30 : vector<16x8xi1>, vector<16x8xi32>
    %cst_12 = arith.constant dense<2147483647> : vector<16xi32>
    %32 = vector.multi_reduction <minsi>, %31, %cst_12 [1] : vector<16x8xi32> to vector<16xi32>
    %33 = vector.shape_cast %32 : vector<16xi32> to vector<16x1xi32>
    %34 = tpu.concatenate %21, %33 in 1 : vector<16x1xi32>, vector<16x1xi32> -> vector<16x2xi32>
    %35 = tpu.concatenate %15, %27 in 1 : vector<16x1xf32>, vector<16x1xf32> -> vector<16x2xf32>
    %cst_13 = arith.constant dense<0.000000e+00> : vector<16xf32>
    %36 = vector.multi_reduction <add>, %35, %cst_13 [1] : vector<16x2xf32> to vector<16xf32>
    %37 = vector.shape_cast %36 : vector<16xf32> to vector<16x1xf32>
    %38 = vector.broadcast %37 : vector<16x1xf32> to vector<16x2xf32>
    %39 = arith.divf %35, %38 : vector<16x2xf32>
    %c0_14 = arith.constant 0 : index
    %c0_15 = arith.constant 0 : index
    %40 = vector.load %arg4[%c0_14, %c0_15] : memref<16x2xf32, #tpu.memory_space<vmem>>, vector<16x2xf32>
    tpu.vector_store %arg4[%c0_14, %c0_15], %39 {strides = array<i32>} : memref<16x2xf32, #tpu.memory_space<vmem>>, vector<16x2xf32>,
    %c0_16 = arith.constant 0 : index
    %c0_17 = arith.constant 0 : index
    %41 = vector.load %arg5[%c0_16, %c0_17] : memref<16x2xi32, #tpu.memory_space<vmem>>, vector<16x2xi32>
    tpu.vector_store %arg5[%c0_16, %c0_17], %34 {strides = array<i32>} : memref<16x2xi32, #tpu.memory_space<vmem>>, vector<16x2xi32>,
    return
  }
  func.func @transform_0(%arg0: i32) -> (i32, i32) {
    %c0_i32 = arith.constant 0 : i32
    %c0_i32_0 = arith.constant 0 : i32
    return %arg0, %c0_i32 : i32, i32
  }
  func.func @transform_1(%arg0: i32) -> (i32, i32) {
    %c0_i32 = arith.constant 0 : i32
    %c0_i32_0 = arith.constant 0 : i32
    %c0_i32_1 = arith.constant 0 : i32
    return %c0_i32, %c0_i32_0 : i32, i32
  }
  func.func @transform_2(%arg0: i32) -> (i32, i32) {
    %c0_i32 = arith.constant 0 : i32
    %c0_i32_0 = arith.constant 0 : i32
    return %arg0, %c0_i32 : i32, i32
  }
  func.func @transform_3(%arg0: i32) -> (i32, i32) {
    %c0_i32 = arith.constant 0 : i32
    %c0_i32_0 = arith.constant 0 : i32
    return %arg0, %c0_i32 : i32, i32
  }
  func.func @transform_4(%arg0: i32) -> (i32, i32) {
    %c0_i32 = arith.constant 0 : i32
    %c0_i32_0 = arith.constant 0 : i32
    return %arg0, %c0_i32 : i32, i32
  }
}

</mosaic_0001>

<llo_original>
// kernel: tpu_custom_call.1
$region0: #{tpu_custom_call.1}
  #allocation0 [shape = 'u32[]', space=smem, size = 0x4, offset = 0x4, fixed_abs, tag = 'smem constant byte address 0x4 - core index']
  #allocation1 [shape = 'u32[144,128]{1,0:T(1,128)}', space=vmem, size = 0x12000, scoped, tag = 'internal scratch']
  %s0 = inlined_call_operand.vmem [shape: f32[16,32], index: 0, kind: input, shape index: {}]
  %s1 = inlined_call_operand.vmem [shape: f32[32,8], index: 1, kind: input, shape index: {}]
  %s2 = inlined_call_operand.vmem [shape: f32[16,8], index: 2, kind: output, shape index: {0}]
  %s3 = inlined_call_operand.vmem [shape: f32[16,2], index: 3, kind: output, shape index: {1}]
  %s4 = inlined_call_operand.vmem [shape: s32[16,2], index: 4, kind: output, shape index: {2}]
  %5 = xla_tuple %s2, %s3, %s4
  %s6 = sld [smem:[#allocation0]]
  $region34: #{tpu_custom_call.1} parent=0
    _
  %s8 = ssub.s32 1, %s6
  %s9 = scalar_select 0, %s8, %s6
  // Predicated region
  $region2: #{tpu_custom_call.1} parent=0 // pred_check
    _
  $region3: #{tpu_custom_call.1} parent=0 // pred_check_branch
    %11 = sbr.rel (0) target = $region5
  $region4: #{tpu_custom_call.1} parent=0 // pred_region
    _
  $region5: #{tpu_custom_call.1} parent=0 // pred_fallthru
    _
  // Predicated region
  $region6: #{tpu_custom_call.1} parent=0 // pred_check
    _
  $region7: #{tpu_custom_call.1} parent=0 // pred_check_branch
    %13 = sbr.rel (0) target = $region9
  $region8: #{tpu_custom_call.1} parent=0 // pred_region
    _
  $region9: #{tpu_custom_call.1} parent=0 // pred_fallthru
    _
  %v14 = vld [vmem:[%s0] sm:$0xff]
  %v15 = vld [vmem:[%s0 + $0x8] sm:$0xff]
  %v16 = vld [vmem:[%s1] sm:$0xff]
  %v17 = vld [vmem:[%s1 + $0x8] sm:$0xff]
  %v18 = vld [vmem:[%s1 + $0x10] sm:$0xff]
  %v19 = vld [vmem:[%s1 + $0x18] sm:$0xff]
  %vm20 = vcmask 261120
  %v22 = vsel %vm20, %v14, 0
  %v25 = vsel %vm20, %v15, 0
  %27 = vmatprep.subr.mxu0 0.0
  %28 = vmatpush1.msra.mxu0 %v16
  %29 = vmatprep.subr.mxu0 0.0
  %30 = vmatpush1.msra.mxu0 %v17
  %31 = vmatprep.subr.mxu0 0.0
  %32 = vmatpush1.msra.mxu0 %v18
  %33 = vmatprep.subr.mxu0 0.0
  %34 = vmatpush1.msra.mxu0 %v19
  %35 = vmatprep.subr.mxu0 0.0
  %36 = vmatpush1.msra.mxu0 0.0
  %37 = vmatprep.subr.mxu0 0.0
  %38 = vmatpush1.msra.mxu0 0.0
  %39 = vmatprep.subr.mxu0 0.0
  %40 = vmatpush1.msra.mxu0 0.0
  %41 = vmatprep.subr.mxu0 0.0
  %42 = vmatpush1.msra.mxu0 0.0
  %43 = vmatprep.subr.mxu0 0.0
  %44 = vmatpush1.msra.mxu0 0.0
  %45 = vmatprep.subr.mxu0 0.0
  %46 = vmatpush1.msra.mxu0 0.0
  %47 = vmatprep.subr.mxu0 0.0
  %48 = vmatpush1.msra.mxu0 0.0
  %49 = vmatprep.subr.mxu0 0.0
  %50 = vmatpush1.msra.mxu0 0.0
  %51 = vmatprep.subr.mxu0 0.0
  %52 = vmatpush1.msra.mxu0 0.0
  %53 = vmatprep.subr.mxu0 0.0
  %54 = vmatpush1.msra.mxu0 0.0
  %55 = vmatprep.subr.mxu0 0.0
  %56 = vmatpush1.msra.mxu0 0.0
  %57 = vmatprep.subr.mxu0 0.0
  %58 = vmatpush1.msra.mxu0 0.0
  %59 = vmatprep.subr.mxu0 0.0
  %60 = vmatpush1.msra.mxu0 0.0
  %61 = vmatprep.subr.mxu0 0.0
  %62 = vmatpush1.msra.mxu0 0.0
  %63 = vmatprep.subr.mxu0 0.0
  %64 = vmatpush1.msra.mxu0 0.0
  %65 = vmatprep.subr.mxu0 0.0
  %66 = vmatpush1.msra.mxu0 0.0
  %67 = vmatprep.subr.mxu0 0.0
  %68 = vmatpush1.msra.mxu0 0.0
  %69 = vmatprep.subr.mxu0 0.0
  %70 = vmatpush1.msra.mxu0 0.0
  %71 = vmatprep.subr.mxu0 0.0
  %72 = vmatpush1.msra.mxu0 0.0
  %73 = vmatprep.subr.mxu0 0.0
  %74 = vmatpush1.msra.mxu0 0.0
  %75 = vmatprep.subr.mxu0 0.0
  %76 = vmatpush1.msra.mxu0 0.0
  %77 = vmatprep.subr.mxu0 0.0
  %78 = vmatpush1.msra.mxu0 0.0
  %79 = vmatprep.subr.mxu0 0.0
  %80 = vmatpush1.msra.mxu0 0.0
  %81 = vmatprep.subr.mxu0 0.0
  %82 = vmatpush1.msra.mxu0 0.0
  %83 = vmatprep.subr.mxu0 0.0
  %84 = vmatpush1.msra.mxu0 0.0
  %85 = vmatprep.subr.mxu0 0.0
  %86 = vmatpush1.msra.mxu0 0.0
  %87 = vmatprep.subr.mxu0 0.0
  %88 = vmatpush1.msra.mxu0 0.0
  %89 = vmatprep.subr.mxu0 0.0
  %90 = vmatpush1.msra.mxu0 0.0
  %91 = vmatprep.mubr.f32.mxu0 0.0
  %92 = vmatmul.mubr.f32.gmra.mrb[0].mxu0 %v22
  %v93 = vpop.f32.mrb[0].mxu0
  %v94 = vadd.f32 0.0, %v93
  %v95 = vpop.f32.mrb[0].mxu0
  %96 = vmatprep.mubr.f32.mxu0 0.0
  %97 = vmatmul.mubr.f32.gmra.mrb[0].mxu0 %v25
  %v98 = vpop.f32.mrb[0].mxu0
  %v99 = vadd.f32 0.0, %v98
  %v100 = vpop.f32.mrb[0].mxu0
  %101 = vdwg.mxu0
  %vm102 = vcmask 64512
  %103 = vst.msk [vmem:[%s2] sm:$0xff] %vm102, %v94
  %104 = vst.msk [vmem:[%s2 + $0x8] sm:$0xff] %vm102, %v99
  %v105 = vsel %vm102, %v94, -inf
  %106 = vmax.xlane.f32.xlu0 %v105
  %v107 = vpop.xlane.xlu0 %106
  %v108 = vsel %vm102, %v99, -inf
  %109 = vmax.xlane.f32.xlu0 %v108
  %v110 = vpop.xlane.xlu0 %109
  %v111 = vsub.f32 %v94, %v107
  %v112 = vsub.f32 %v99, %v110
  %v113 = vmul.f32 %v111, 1.442695
  %v114 = vpow.pop %v113
  %v115 = vmul.f32 %v112, 1.442695
  %v116 = vpow.pop %v115
  %v117 = vsel %vm102, %v114, 0.0
  %118 = vadd.xlane.f32.xlu0 %v117
  %v119 = vpop.xlane.xlu0 %118
  %v120 = vsel %vm102, %v116, 0.0
  %121 = vadd.xlane.f32.xlu0 %v120
  %v122 = vpop.xlane.xlu0 %121
  %v123 = vrcp.pop %v119
  %v124 = vmul.f32 %v114, %v123
  %v125 = vrcp.pop %v122
  %v126 = vmul.f32 %v116, %v125
  %v127 = vlaneseq
  %v128 = vand.u32 %v127, 127
  %v129 = vsel %vm102, %v124, -inf
  %130 = vmax.xlane.f32.xlu0 %v129
  %v131 = vpop.xlane.xlu0 %130
  %v132 = vsel %vm102, %v126, -inf
  %133 = vmax.xlane.f32.xlu0 %v132
  %v134 = vpop.xlane.xlu0 %133
  %vm135 = vcmp.eq.f32.partialorder %v124, %v131
  %vm136 = vcmp.eq.f32.partialorder %v126, %v134
  %v137 = vsel %vm135, %v128, 8
  %v138 = vsel %vm136, %v128, 8
  %v139 = vsel %vm102, %v137, 2147483647
  %v140 = vand.u32 %v139, 65535
  %v141 = vshra.s32 %v139, 16
  %v142 = vcvt.s32.f32 %v140
  %v143 = vcvt.s32.f32 %v141
  %144 = vmin.xlane.f32.xlu0 %v143
  %v145 = vpop.xlane.xlu0 %144
  %vm146 = vcmp.eq.f32.partialorder %v143, %v145
  %v147 = vsel %vm146, %v142, inf
  %148 = vmin.xlane.f32.xlu0 %v147
  %v149 = vpop.xlane.xlu0 %148
  %v150 = vcvt.f32.s32 %v149
  %v151 = vcvt.f32.s32 %v145
  %v152 = vshll.u32 %v151, 16
  %v153 = vadd.s32 %v152, %v150
  %v154 = vsel %vm102, %v138, 2147483647
  %v155 = vand.u32 %v154, 65535
  %v156 = vshra.s32 %v154, 16
  %v157 = vcvt.s32.f32 %v155
  %v158 = vcvt.s32.f32 %v156
  %159 = vmin.xlane.f32.xlu0 %v158
  %v160 = vpop.xlane.xlu0 %159
  %vm161 = vcmp.eq.f32.partialorder %v158, %v160
  %v162 = vsel %vm161, %v157, inf
  %163 = vmin.xlane.f32.xlu0 %v162
  %v164 = vpop.xlane.xlu0 %163
  %v165 = vcvt.f32.s32 %v164
  %v166 = vcvt.f32.s32 %v160
  %v167 = vshll.u32 %v166, 16
  %v168 = vadd.s32 %v167, %v165
  %vm169 = vcmp.eq.s32.totalorder %v128, %v153
  %vm170 = vcmp.eq.s32.totalorder %v128, %v168
  %v171 = vsel %vm169, -1.0, %v124
  %v172 = vsel %vm170, -1.0, %v126
  %v173 = vsel %vm102, %v171, -inf
  %174 = vmax.xlane.f32.xlu0 %v173
  %v175 = vpop.xlane.xlu0 %174
  %v176 = vsel %vm102, %v172, -inf
  %177 = vmax.xlane.f32.xlu0 %v176
  %v178 = vpop.xlane.xlu0 %177
  %vm179 = vcmp.eq.f32.partialorder %v171, %v175
  %vm180 = vcmp.eq.f32.partialorder %v172, %v178
  %v181 = vsel %vm179, %v128, 8
  %v182 = vsel %vm180, %v128, 8
  %v183 = vsel %vm102, %v181, 2147483647
  %v184 = vand.u32 %v183, 65535
  %v185 = vshra.s32 %v183, 16
  %v186 = vcvt.s32.f32 %v184
  %v187 = vcvt.s32.f32 %v185
  %188 = vmin.xlane.f32.xlu0 %v187
  %v189 = vpop.xlane.xlu0 %188
  %vm190 = vcmp.eq.f32.partialorder %v187, %v189
  %v191 = vsel %vm190, %v186, inf
  %192 = vmin.xlane.f32.xlu0 %v191
  %v193 = vpop.xlane.xlu0 %192
  %v194 = vcvt.f32.s32 %v193
  %v195 = vcvt.f32.s32 %v189
  %v196 = vshll.u32 %v195, 16
  %v197 = vadd.s32 %v196, %v194
  %v198 = vsel %vm102, %v182, 2147483647
  %v199 = vand.u32 %v198, 65535
  %v200 = vshra.s32 %v198, 16
  %v201 = vcvt.s32.f32 %v199
  %v202 = vcvt.s32.f32 %v200
  %203 = vmin.xlane.f32.xlu0 %v202
  %v204 = vpop.xlane.xlu0 %203
  %vm205 = vcmp.eq.f32.partialorder %v202, %v204
  %v206 = vsel %vm205, %v201, inf
  %207 = vmin.xlane.f32.xlu0 %v206
  %v208 = vpop.xlane.xlu0 %207
  %v209 = vcvt.f32.s32 %v208
  %v210 = vcvt.f32.s32 %v204
  %v211 = vshll.u32 %v210, 16
  %v212 = vadd.s32 %v211, %v209
  %vm213 = vcmask 7168
  %v214 = vsel %vm213, %v153, %v197
  %v215 = vsel %vm213, %v168, %v212
  %v216 = vsel %vm213, %v131, %v175
  %v217 = vsel %vm213, %v134, %v178
  %vm218 = vcmask 15360
  %v219 = vsel %vm218, %v216, 0.0
  %220 = vadd.xlane.f32.xlu0 %v219
  %v221 = vpop.xlane.xlu0 %220
  %v222 = vsel %vm218, %v217, 0.0
  %223 = vadd.xlane.f32.xlu0 %v222
  %v224 = vpop.xlane.xlu0 %223
  %v225 = vrcp.pop %v221
  %v226 = vmul.f32 %v216, %v225
  %v227 = vrcp.pop %v224
  %v228 = vmul.f32 %v217, %v227
  %229 = vst.msk [vmem:[%s3] sm:$0xff] %vm218, %v226
  %230 = vst.msk [vmem:[%s3 + $0x8] sm:$0xff] %vm218, %v228
  %231 = vst.msk [vmem:[%s4] sm:$0xff] %vm218, %v214
  %232 = vst.msk [vmem:[%s4 + $0x8] sm:$0xff] %vm218, %v215
  // Predicated region
  $region10: #{tpu_custom_call.1} parent=0 // pred_check
    _
  $region11: #{tpu_custom_call.1} parent=0 // pred_check_branch
    %234 = sbr.rel (0) target = $region13
  $region12: #{tpu_custom_call.1} parent=0 // pred_region
    _
  $region13: #{tpu_custom_call.1} parent=0 // pred_fallthru
    _
  // Predicated region
  $region14: #{tpu_custom_call.1} parent=0 // pred_check
    _
  $region15: #{tpu_custom_call.1} parent=0 // pred_check_branch
    %236 = sbr.rel (0) target = $region17
  $region16: #{tpu_custom_call.1} parent=0 // pred_region
    _
  $region17: #{tpu_custom_call.1} parent=0 // pred_fallthru
    _
  // Predicated region
  $region18: #{tpu_custom_call.1} parent=0 // pred_check
    _
  $region19: #{tpu_custom_call.1} parent=0 // pred_check_branch
    %238 = sbr.rel (0) target = $region21
  $region20: #{tpu_custom_call.1} parent=0 // pred_region
    _
  $region21: #{tpu_custom_call.1} parent=0 // pred_fallthru
    _
  // Predicated region
  $region22: #{tpu_custom_call.1} parent=0 // pred_check
    _
  $region23: #{tpu_custom_call.1} parent=0 // pred_check_branch
    %240 = sbr.rel (0) target = $region25
  $region24: #{tpu_custom_call.1} parent=0 // pred_region
    _
  $region25: #{tpu_custom_call.1} parent=0 // pred_fallthru
    _
  // Predicated region
  $region26: #{tpu_custom_call.1} parent=0 // pred_check
    _
  $region27: #{tpu_custom_call.1} parent=0 // pred_check_branch
    %242 = sbr.rel (0) target = $region29
  $region28: #{tpu_custom_call.1} parent=0 // pred_region
    _
  $region29: #{tpu_custom_call.1} parent=0 // pred_fallthru
    _
  // Predicated region
  $region30: #{tpu_custom_call.1} parent=0 // pred_check
    _
  $region31: #{tpu_custom_call.1} parent=0 // pred_check_branch
    %244 = sbr.rel (0) target = $region33
  $region32: #{tpu_custom_call.1} parent=0 // pred_region
    _
  $region33: #{tpu_custom_call.1} parent=0 // pred_fallthru
    _

</llo_original>
